<compile_context>
chip_gen: v7x
topology: tpu7x:2x2x1
jax: 0.10.0
libtpu: 0.0.40
codegen_flags: <defaults>
</compile_context>

<pallas_src>
import functools

import jax
import jax.numpy as jnp
from jax import lax
from jax.experimental import pallas as pl
from jax.experimental.pallas import tpu as pltpu


def _ntxent_kernel(q_ref, k_ref, out_ref, m_ref, l_ref, pos_ref, *,
                   n, batch_size, tq, tk, inv_temp, use_cosine,
                   aligned_pos, has_col_pad):
    """One (row-tile i, col-tile k) step over the (n_pad, n_pad) logits matrix.

    q_ref  : (tq, D) rows i*tq.. of the normalized * inv_temp reps (Q side)
    k_ref  : (tk, D) rows k*tk.. of the normalized reps            (K side)
    out_ref: (tq, 1) per-row [ logsumexp_{j != i} logits - positive_logit ]
    m_ref, l_ref, pos_ref: (tq, 1) f32 running max / sum-exp / positive.
    m_ref is only consumed on the dot-product path (cosine uses a fixed shift).
    """
    i = pl.program_id(0)
    k = pl.program_id(1)
    nk = pl.num_programs(1)

    # ---- once per row tile: init accumulators -------------------------------
    @pl.when(k == 0)
    def _init():
        m_ref[...] = jnp.full_like(m_ref, -jnp.inf)
        l_ref[...] = jnp.zeros_like(l_ref)
        pos_ref[...] = jnp.zeros_like(pos_ref)

    # ---- similarity tile on the MXU: contract feature dims, no transpose ----
    s = lax.dot_general(q_ref[...], k_ref[...], (((1,), (1,)), ((), ())),
                        preferred_element_type=jnp.float32)        # (tq, tk)

    # ---- positives: column j = (row + B) mod n ------------------------------
    def _accum_pos():
        row_g = i * tq + lax.broadcasted_iota(jnp.int32, (tq, tk), 0)
        col_g = k * tk + lax.broadcasted_iota(jnp.int32, (tq, tk), 1)
        pmask = jnp.abs(row_g - col_g) == batch_size
        # Padded K rows are exactly zero, so any spurious match on a padded
        # column contributes 0 and cannot corrupt pos_ref.
        pos_ref[...] += jnp.sum(jnp.where(pmask, s, 0.0),
                                axis=-1, keepdims=True)

    if aligned_pos:
        # batch_size % tq == 0 and tk | tq  ->  the positives of row tile i
        # occupy a contiguous, tq-aligned block of columns of width tq.
        col_start = (i * tq + batch_size) % n
        gate = jnp.logical_and(k * tk >= col_start, k * tk < col_start + tq)
        pl.when(gate)(_accum_pos)
    else:
        _accum_pos()

    # ---- logsumexp accumulation over all columns j --------------------------
    if use_cosine:
        # |cos| <= 1 => logits <= inv_temp: fixed shift m = inv_temp, no
        # online max, no diagonal mask.  The self-logit's contribution is
        # exp(0) == 1 and is subtracted at finalize.
        def _acc(p):
            l_ref[...] += jnp.sum(p, axis=-1, keepdims=True)

        if has_col_pad:
            @pl.when((k + 1) * tk <= n)
            def _full():
                _acc(jnp.exp(s - inv_temp))

            @pl.when((k + 1) * tk > n)
            def _tail():
                col_g = k * tk + lax.broadcasted_iota(jnp.int32, (tq, tk), 1)
                _acc(jnp.where(col_g < n, jnp.exp(s - inv_temp), 0.0))
        else:
            _acc(jnp.exp(s - inv_temp))
    else:
        # Dot-product logits are unbounded: keep the online max, and mask the
        # self-similarity (and padded columns) to -inf on the tiles that need it.
        def _update(s_val):
            m_prev = m_ref[...]
            m_new = jnp.maximum(m_prev, jnp.max(s_val, axis=-1, keepdims=True))
            alpha = jnp.exp(m_prev - m_new)
            l_ref[...] = alpha * l_ref[...] + jnp.sum(
                jnp.exp(s_val - m_new), axis=-1, keepdims=True)
            m_ref[...] = m_new

        diag_gate = jnp.logical_and(k * tk >= i * tq, k * tk < (i + 1) * tq)
        if has_col_pad:
            mask_gate = jnp.logical_or(diag_gate, (k + 1) * tk > n)
        else:
            mask_gate = diag_gate

        @pl.when(mask_gate)
        def _masked_update():
            row_g = i * tq + lax.broadcasted_iota(jnp.int32, (tq, tk), 0)
            col_g = k * tk + lax.broadcasted_iota(jnp.int32, (tq, tk), 1)
            bad = row_g == col_g
            if has_col_pad:
                bad = jnp.logical_or(bad, col_g >= n)
            _update(jnp.where(bad, -jnp.inf, s))

        @pl.when(jnp.logical_not(mask_gate))
        def _plain_update():
            _update(s)

    # ---- finalize this row tile ---------------------------------------------
    @pl.when(k == nk - 1)
    def _finalize():
        if use_cosine:
            lse = inv_temp + jnp.log(l_ref[...] - 1.0)   # remove self term
        else:
            lse = m_ref[...] + jnp.log(l_ref[...])
        out_ref[...] = lse - pos_ref[...]


def _largest_tile(value, cap):
    """Largest multiple of 8 that divides `value` and is <= cap (0 if none)."""
    best = 0
    t = 8
    while t <= min(cap, value):
        if value % t == 0:
            best = t
        t += 8
    return best


def _round_up(x, m):
    return ((x + m - 1) // m) * m


def ntxent_loss(zis, zjs, *, batch_size, temperature,
                use_cosine_similarity=True, tq_cap=512, tk_cap=256,
                stream_dtype=jnp.float32):
    """NT-Xent loss matching the PyTorch NTXentLoss.forward semantics."""
    assert zis.shape == zjs.shape and zis.shape[0] == batch_size
    d = zis.shape[1]
    n = 2 * batch_size
    inv_temp = 1.0 / float(temperature)

    # representations = cat([zjs, zis]) exactly as in the PyTorch module.
    reps = jnp.concatenate([zjs, zis], axis=0).astype(jnp.float32)

    # Normalization + 1/temperature scale hoisted out of the kernel.
    # (eps clamp is per-vector instead of on the product of norms as in the
    # reference: tolerance-level difference for near-zero embeddings only.)
    if use_cosine_similarity:
        reps = reps * lax.rsqrt(
            jnp.maximum(jnp.sum(reps * reps, axis=-1, keepdims=True), 1e-16))
    k_arr = reps.astype(stream_dtype)
    q_arr = (reps * jnp.float32(inv_temp)).astype(stream_dtype)

    # ---- tiling: tall row tiles (TQ), narrow column tiles (TK) --------------
    tq = _largest_tile(batch_size, tq_cap)
    if tq > 0:
        aligned_pos = True                 # B % tq == 0 -> gated positives,
        tk = _largest_tile(tq, tk_cap)     # tk | tq, >= 2 even row tiles.
        n_pad = n
    else:
        # batch_size has no multiple-of-8 divisor: pad n up to a fixed tile and
        # mask padded columns inside the kernel (padded rows are zeros).
        aligned_pos = False
        tq = tk = min(128, _round_up(n, 8))
        n_pad = _round_up(n, tq)

    # VMEM budget (v7x has 64 MiB physical): shrink TQ if the estimate is big.
    bytes_el = jnp.dtype(stream_dtype).itemsize

    def _vmem_estimate(tq_, tk_):
        return (2 * tq_ * d * bytes_el          # Q block, double-buffered
                + 2 * tk_ * d * bytes_el        # K block, double-buffered
                + 3 * tq_ * tk_ * 4             # logits / exp temporaries
                + 2 * tq_ * 4 + 3 * tq_ * 4)    # out block + accumulators

    vmem_budget = 40 * 2**20
    while aligned_pos and _vmem_estimate(tq, tk) > vmem_budget and tq > 8:
        new_tq = _largest_tile(batch_size, tq - 8)
        if new_tq == 0 or new_tq >= tq:
            break
        tq = new_tq
        tk = _largest_tile(tq, tk_cap)

    has_col_pad = n_pad > n
    if has_col_pad:
        pad = n_pad - n
        q_arr = jnp.pad(q_arr, ((0, pad), (0, 0)))
        k_arr = jnp.pad(k_arr, ((0, pad), (0, 0)))

    kernel = functools.partial(
        _ntxent_kernel,
        n=n, batch_size=batch_size, tq=tq, tk=tk, inv_temp=inv_temp,
        use_cosine=bool(use_cosine_similarity),
        aligned_pos=aligned_pos, has_col_pad=has_col_pad)

    vmem_limit = int(min(60 * 2**20,
                         max(32 * 2**20, 2 * _vmem_estimate(tq, tk))))

    per_row = pl.pallas_call(
        kernel,
        out_shape=jax.ShapeDtypeStruct((n_pad, 1), jnp.float32),
        grid_spec=pltpu.PrefetchScalarGridSpec(
            num_scalar_prefetch=0,
            grid=(n_pad // tq, n_pad // tk),
            in_specs=[pl.BlockSpec((tq, d), lambda i, k: (i, 0)),   # Q rows
                      pl.BlockSpec((tk, d), lambda i, k: (k, 0))],  # K rows
            out_specs=pl.BlockSpec((tq, 1), lambda i, k: (i, 0)),
            scratch_shapes=[pltpu.VMEM((tq, 1), jnp.float32),   # running max
                            pltpu.VMEM((tq, 1), jnp.float32),   # running sum
                            pltpu.VMEM((tq, 1), jnp.float32)],  # positives
        ),
        compiler_params=pltpu.CompilerParams(
            dimension_semantics=("parallel", "arbitrary"),
            vmem_limit_bytes=vmem_limit),
    )(q_arr, k_arr)

    # CrossEntropyLoss(reduction='sum') / (2B); padded rows are dropped.
    return jnp.sum(per_row[:n]) / jnp.float32(n)


def _reference_ntxent(zis, zjs, batch_size, temperature, use_cosine):
    """Pure-JAX reference mirroring the PyTorch forward exactly."""
    reps = jnp.concatenate([zjs, zis], axis=0)
    n = 2 * batch_size
    sim = reps @ reps.T
    if use_cosine:
        norms = jnp.linalg.norm(reps, axis=-1, keepdims=True)
        sim = sim / jnp.maximum(norms * norms.T, 1e-8)
    l_pos = jnp.diagonal(sim, offset=batch_size)
    r_pos = jnp.diagonal(sim, offset=-batch_size)
    positives = jnp.concatenate([l_pos, r_pos]).reshape(n, 1)
    eye = jnp.eye(n)
    off1 = jnp.eye(n, k=-batch_size)
    off2 = jnp.eye(n, k=batch_size)
    mask = (1 - (eye + off1 + off2)).astype(bool)
    negatives = sim[mask].reshape(n, -1)
    logits = jnp.concatenate([positives, negatives], axis=1) / temperature
    logp = jax.nn.log_softmax(logits, axis=-1)
    loss = -jnp.sum(logp[:, 0])
    return loss / n


if __name__ == "__main__":
    batch_size = 64
    feat_dim = 128
    temperature = 0.5

    key = jax.random.PRNGKey(0)
    k1, k2 = jax.random.split(key)
    zis = jax.random.normal(k1, (batch_size, feat_dim), dtype=jnp.float32)
    zjs = jax.random.normal(k2, (batch_size, feat_dim), dtype=jnp.float32)

    # Cosine-similarity path (default SimCLR config): aligned tiled grid.
    loss_cos = ntxent_loss(zis, zjs, batch_size=batch_size,
                           temperature=temperature, use_cosine_similarity=True)
    loss_cos = jax.block_until_ready(loss_cos)
    ref_cos = _reference_ntxent(zis, zjs, batch_size, temperature, True)
    assert jnp.allclose(loss_cos, ref_cos, rtol=1e-4, atol=1e-4), (loss_cos, ref_cos)

    # Dot-product-similarity path (online max + diagonal mask).
    loss_dot = ntxent_loss(zis, zjs, batch_size=batch_size,
                           temperature=temperature, use_cosine_similarity=False)
    loss_dot = jax.block_until_ready(loss_dot)
    ref_dot = _reference_ntxent(zis, zjs, batch_size, temperature, False)
    assert jnp.allclose(loss_dot, ref_dot, rtol=1e-4, atol=1e-4), (loss_dot, ref_dot)

    # Optional bf16 streaming (halves K-stream HBM traffic, bf16 MXU path);
    # looser tolerance by design.
    loss_bf16 = ntxent_loss(zis, zjs, batch_size=batch_size,
                            temperature=temperature, use_cosine_similarity=True,
                            stream_dtype=jnp.bfloat16)
    loss_bf16 = jax.block_until_ready(loss_bf16)
    assert jnp.allclose(loss_bf16, ref_cos, rtol=5e-2, atol=5e-2), (loss_bf16, ref_cos)

    # Tiny batch (no multiple-of-8 divisor): padded fast path, no padding needed.
    loss_s = ntxent_loss(zis[:4], zjs[:4], batch_size=4,
                         temperature=temperature, use_cosine_similarity=True)
    loss_s = jax.block_until_ready(loss_s)
    ref_s = _reference_ntxent(zis[:4], zjs[:4], 4, temperature, True)
    assert jnp.allclose(loss_s, ref_s, rtol=1e-4, atol=1e-4), (loss_s, ref_s)

    # Awkward batch that actually exercises the padded-column masking (n=12 -> 16).
    for use_cos in (True, False):
        loss_p = ntxent_loss(zis[:6], zjs[:6], batch_size=6,
                             temperature=temperature,
                             use_cosine_similarity=use_cos)
        loss_p = jax.block_until_ready(loss_p)
        ref_p = _reference_ntxent(zis[:6], zjs[:6], 6, temperature, use_cos)
        assert jnp.allclose(loss_p, ref_p, rtol=1e-4, atol=1e-4), (loss_p, ref_p)

    print("KERNEL_OK")
</pallas_src>

<mosaic_0001>
module attributes {stable_mosaic.version = 11 : i64} {
  func.func @_ntxent_kernel(%arg0: i32, %arg1: i32, %arg2: memref<64x128xf32, #tpu.memory_space<vmem>>, %arg3: memref<64x128xf32, #tpu.memory_space<vmem>>, %arg4: memref<64x1xf32, #tpu.memory_space<vmem>>, %arg5: memref<64x1xf32, #tpu.memory_space<vmem>>, %arg6: memref<64x1xf32, #tpu.memory_space<vmem>>, %arg7: memref<64x1xf32, #tpu.memory_space<vmem>>) attributes {dimension_semantics = [#tpu.dimension_semantics<parallel>, #tpu.dimension_semantics<arbitrary>], iteration_bounds = array<i64: 2, 2>, scalar_prefetch = 0 : i64, scratch_operands = 3 : i64, tpu.core_type = #tpu.core_type<tc>, window_params = [{transform_indices = @transform_0, window_bounds = array<i64: 64, 128>}, {transform_indices = @transform_1, window_bounds = array<i64: 64, 128>}, {transform_indices = @transform_2, window_bounds = array<i64: 64, 1>}]} {
    %c0_i32 = arith.constant 0 : i32
    %0 = arith.cmpi eq, %arg1, %c0_i32 : i32
    %1 = arith.extui %0 : i1 to i32
    %c0_i32_0 = arith.constant 0 : i32
    %2 = arith.cmpi ne, %1, %c0_i32_0 : i32
    scf.if %2 {
      %cst_21 = arith.constant 0xFF800000 : f32
      %37 = vector.broadcast %cst_21 : f32 to vector<64x1xf32>
      %c0_22 = arith.constant 0 : index
      %c0_23 = arith.constant 0 : index
      %38 = vector.load %arg5[%c0_22, %c0_23] : memref<64x1xf32, #tpu.memory_space<vmem>>, vector<64x1xf32>
      tpu.vector_store %arg5[%c0_22, %c0_23], %37 {strides = array<i32>} : memref<64x1xf32, #tpu.memory_space<vmem>>, vector<64x1xf32>,
      %cst_24 = arith.constant 0.000000e+00 : f32
      %39 = vector.broadcast %cst_24 : f32 to vector<64x1xf32>
      %c0_25 = arith.constant 0 : index
      %c0_26 = arith.constant 0 : index
      %40 = vector.load %arg6[%c0_25, %c0_26] : memref<64x1xf32, #tpu.memory_space<vmem>>, vector<64x1xf32>
      tpu.vector_store %arg6[%c0_25, %c0_26], %39 {strides = array<i32>} : memref<64x1xf32, #tpu.memory_space<vmem>>, vector<64x1xf32>,
      %cst_27 = arith.constant 0.000000e+00 : f32
      %41 = vector.broadcast %cst_27 : f32 to vector<64x1xf32>
      %c0_28 = arith.constant 0 : index
      %c0_29 = arith.constant 0 : index
      %42 = vector.load %arg7[%c0_28, %c0_29] : memref<64x1xf32, #tpu.memory_space<vmem>>, vector<64x1xf32>
      tpu.vector_store %arg7[%c0_28, %c0_29], %41 {strides = array<i32>} : memref<64x1xf32, #tpu.memory_space<vmem>>, vector<64x1xf32>,
    } else {
    }
    %c0 = arith.constant 0 : index
    %c0_1 = arith.constant 0 : index
    %3 = vector.load %arg2[%c0, %c0_1] : memref<64x128xf32, #tpu.memory_space<vmem>>, vector<64x128xf32>
    %c0_2 = arith.constant 0 : index
    %c0_3 = arith.constant 0 : index
    %4 = vector.load %arg3[%c0_2, %c0_3] : memref<64x128xf32, #tpu.memory_space<vmem>>, vector<64x128xf32>
    %cst = arith.constant dense<0.000000e+00> : vector<64x64xf32>
    %5 = tpu.matmul %3, %4, %cst {dimension_numbers = #tpu.dot_dimension_numbers<[1], [1], [0], [0], [0, 0, 1, 0], [], []>} : vector<64x128xf32>, vector<64x128xf32>, vector<64x64xf32> -> vector<64x64xf32>
    %c64_i32 = arith.constant 64 : i32
    %6 = arith.muli %arg0, %c64_i32 : i32
    %c64_i32_4 = arith.constant 64 : i32
    %7 = arith.addi %6, %c64_i32_4 : i32
    %c128_i32 = arith.constant 128 : i32
    %c0_i32_5 = arith.constant 0 : i32
    %8 = arith.cmpi eq, %c128_i32, %c0_i32_5 : i32
    %c1_i32 = arith.constant 1 : i32
    %9 = arith.select %8, %c1_i32, %c128_i32 : i32
    %10 = arith.remsi %7, %9 : i32
    %c0_i32_6 = arith.constant 0 : i32
    %11 = arith.cmpi ne, %10, %c0_i32_6 : i32
    %c0_i32_7 = arith.constant 0 : i32
    %12 = arith.cmpi slt, %10, %c0_i32_7 : i32
    %c0_i32_8 = arith.constant 0 : i32
    %13 = arith.cmpi slt, %9, %c0_i32_8 : i32
    %14 = arith.xori %12, %13 : i1
    %15 = arith.andi %14, %11 : i1
    %16 = arith.addi %10, %9 : i32
    %17 = arith.select %15, %16, %10 : i32
    %c64_i32_9 = arith.constant 64 : i32
    %18 = arith.muli %arg1, %c64_i32_9 : i32
    %19 = arith.cmpi sge, %18, %17 : i32
    %c64_i32_10 = arith.constant 64 : i32
    %20 = arith.muli %arg1, %c64_i32_10 : i32
    %c64_i32_11 = arith.constant 64 : i32
    %21 = arith.addi %17, %c64_i32_11 : i32
    %22 = arith.cmpi slt, %20, %21 : i32
    %23 = arith.andi %19, %22 : i1
    %24 = arith.extui %23 : i1 to i32
    %c0_i32_12 = arith.constant 0 : i32
    %25 = arith.cmpi ne, %24, %c0_i32_12 : i32
    scf.if %25 {
      %c64_i32_21 = arith.constant 64 : i32
      %37 = arith.muli %arg0, %c64_i32_21 : i32
      %38 = tpu.iota {dimensions = array<i32: 0>} : vector<64x64xi32>
      %39 = vector.broadcast %37 : i32 to vector<64x64xi32>
      %40 = arith.addi %39, %38 : vector<64x64xi32>
      %c64_i32_22 = arith.constant 64 : i32
      %41 = arith.muli %arg1, %c64_i32_22 : i32
      %42 = tpu.iota {dimensions = array<i32: 1>} : vector<64x64xi32>
      %43 = vector.broadcast %41 : i32 to vector<64x64xi32>
      %44 = arith.addi %43, %42 : vector<64x64xi32>
      %45 = arith.subi %40, %44 : vector<64x64xi32>
      %46 = math.absi %45 : vector<64x64xi32>
      %c64_i32_23 = arith.constant 64 : i32
      %47 = vector.broadcast %c64_i32_23 : i32 to vector<64x64xi32>
      %48 = arith.cmpi eq, %46, %47 : vector<64x64xi32>
      %c0_24 = arith.constant 0 : index
      %c0_25 = arith.constant 0 : index
      %49 = vector.load %arg7[%c0_24, %c0_25] : memref<64x1xf32, #tpu.memory_space<vmem>>, vector<64x1xf32>
      %cst_26 = arith.constant 0.000000e+00 : f32
      %50 = vector.broadcast %cst_26 : f32 to vector<64x64xf32>
      %51 = arith.select %48, %5, %50 : vector<64x64xi1>, vector<64x64xf32>
      %cst_27 = arith.constant dense<0.000000e+00> : vector<64xf32>
      %52 = vector.multi_reduction <add>, %51, %cst_27 [1] : vector<64x64xf32> to vector<64xf32>
      %53 = vector.shape_cast %52 : vector<64xf32> to vector<64x1xf32>
      %54 = arith.addf %49, %53 : vector<64x1xf32>
      %c0_28 = arith.constant 0 : index
      %c0_29 = arith.constant 0 : index
      %55 = vector.load %arg7[%c0_28, %c0_29] : memref<64x1xf32, #tpu.memory_space<vmem>>, vector<64x1xf32>
      tpu.vector_store %arg7[%c0_28, %c0_29], %54 {strides = array<i32>} : memref<64x1xf32, #tpu.memory_space<vmem>>, vector<64x1xf32>,
    } else {
    }
    %cst_13 = arith.constant 2.000000e+00 : f32
    %26 = vector.broadcast %cst_13 : f32 to vector<64x64xf32>
    %27 = arith.subf %5, %26 : vector<64x64xf32>
    %28 = math.exp %27 : vector<64x64xf32>
    %c0_14 = arith.constant 0 : index
    %c0_15 = arith.constant 0 : index
    %29 = vector.load %arg6[%c0_14, %c0_15] : memref<64x1xf32, #tpu.memory_space<vmem>>, vector<64x1xf32>
    %cst_16 = arith.constant dense<0.000000e+00> : vector<64xf32>
    %30 = vector.multi_reduction <add>, %28, %cst_16 [1] : vector<64x64xf32> to vector<64xf32>
    %31 = vector.shape_cast %30 : vector<64xf32> to vector<64x1xf32>
    %32 = arith.addf %29, %31 : vector<64x1xf32>
    %c0_17 = arith.constant 0 : index
    %c0_18 = arith.constant 0 : index
    %33 = vector.load %arg6[%c0_17, %c0_18] : memref<64x1xf32, #tpu.memory_space<vmem>>, vector<64x1xf32>
    tpu.vector_store %arg6[%c0_17, %c0_18], %32 {strides = array<i32>} : memref<64x1xf32, #tpu.memory_space<vmem>>, vector<64x1xf32>,
    %c1_i32_19 = arith.constant 1 : i32
    %34 = arith.cmpi eq, %arg1, %c1_i32_19 : i32
    %35 = arith.extui %34 : i1 to i32
    %c0_i32_20 = arith.constant 0 : i32
    %36 = arith.cmpi ne, %35, %c0_i32_20 : i32
    scf.if %36 {
      %c0_21 = arith.constant 0 : index
      %c0_22 = arith.constant 0 : index
      %37 = vector.load %arg6[%c0_21, %c0_22] : memref<64x1xf32, #tpu.memory_space<vmem>>, vector<64x1xf32>
      %cst_23 = arith.constant 1.000000e+00 : f32
      %38 = vector.broadcast %cst_23 : f32 to vector<64x1xf32>
      %39 = arith.subf %37, %38 : vector<64x1xf32>
      %40 = math.log %39 : vector<64x1xf32>
      %cst_24 = arith.constant 2.000000e+00 : f32
      %41 = vector.broadcast %cst_24 : f32 to vector<64x1xf32>
      %42 = arith.addf %41, %40 : vector<64x1xf32>
      %c0_25 = arith.constant 0 : index
      %c0_26 = arith.constant 0 : index
      %43 = vector.load %arg7[%c0_25, %c0_26] : memref<64x1xf32, #tpu.memory_space<vmem>>, vector<64x1xf32>
      %44 = arith.subf %42, %43 : vector<64x1xf32>
      %c0_27 = arith.constant 0 : index
      %c0_28 = arith.constant 0 : index
      %45 = vector.load %arg4[%c0_27, %c0_28] : memref<64x1xf32, #tpu.memory_space<vmem>>, vector<64x1xf32>
      tpu.vector_store %arg4[%c0_27, %c0_28], %44 {strides = array<i32>} : memref<64x1xf32, #tpu.memory_space<vmem>>, vector<64x1xf32>,
    } else {
    }
    return
  }
  func.func @transform_0(%arg0: i32, %arg1: i32) -> (i32, i32) {
    %c0_i32 = arith.constant 0 : i32
    %c0_i32_0 = arith.constant 0 : i32
    return %arg0, %c0_i32 : i32, i32
  }
  func.func @transform_1(%arg0: i32, %arg1: i32) -> (i32, i32) {
    %c0_i32 = arith.constant 0 : i32
    %c0_i32_0 = arith.constant 0 : i32
    return %arg1, %c0_i32 : i32, i32
  }
  func.func @transform_2(%arg0: i32, %arg1: i32) -> (i32, i32) {
    %c0_i32 = arith.constant 0 : i32
    %c0_i32_0 = arith.constant 0 : i32
    return %arg0, %c0_i32 : i32, i32
  }
}

</mosaic_0001>

<llo_original>
// kernel: tpu_custom_call.1
$region0: #{tpu_custom_call.1}
  #allocation0 [shape = 'u32[]', space=smem, size = 0x4, offset = 0x4, fixed_abs, tag = 'smem constant byte address 0x4 - core index']
  #allocation1 [shape = 'u32[144,128]{1,0:T(1,128)}', space=vmem, size = 0x12000, scoped, tag = 'internal scratch']
  #allocation2 [shape = 'f32[64,1]{1,0:T(8,128)}', space=vmem, size = 0x8000, scoped, tag = 'scratch operand']
  #allocation3 [shape = 'f32[64,1]{1,0:T(8,128)}', space=vmem, size = 0x8000, scoped, tag = 'scratch operand']
  #allocation4 [shape = 'f32[64,1]{1,0:T(8,128)}', space=vmem, size = 0x8000, scoped, tag = 'scratch operand']
  %s0 = inlined_call_operand.hbm [shape: f32[128,128], index: 0, kind: input, shape index: {}]
  %s1 = inlined_call_operand.hbm [shape: f32[128,128], index: 1, kind: input, shape index: {}]
  %s2 = inlined_call_operand.vmem [shape: f32[128,1], index: 2, kind: output, shape index: {}]
  %s3 = sld [smem:[#allocation0]]
  $region61: #{tpu_custom_call.1} parent=0
    _
  %s5 = ssub.s32 1, %s3
  %s6 = scalar_select 0, %s5, %s3
  $region1: #{tpu_custom_call.1} parent=0
    #allocation5 [shape = 'u8[65536]{0}', space=vmem, size = 0x10000, scoped, tag = 'input window, operand 0']
    #allocation6 [shape = 's32[2]{0}', space=sflag, size = 0x8, scoped, tag = 'scoped memory for tpu_custom_call.1']
    #allocation7 [shape = 'u8[65536]{0}', space=vmem, size = 0x10000, scoped, tag = 'input window, operand 1']
    #allocation8 [shape = 's32[2]{0}', space=sflag, size = 0x8, scoped, tag = 'scoped memory for tpu_custom_call.1']
    %7 = vsyncpa [#allocation6], 0
    %s8 = scalar_lea.sflag [#allocation6], 1
    %9 = vsyncpa %s8, 0
    %10 = vsyncpa [#allocation8], 0
    %s11 = scalar_lea.sflag [#allocation8], 1
    %12 = vsyncpa %s11, 0
    loop: start=0, step=1, limit=6
    $region2: #{tpu_custom_call.1} parent=1 // loop_pre_header
      _
    $region3: #{tpu_custom_call.1} parent=1 // loop_header
      %s14 = sphi 0, %s18
      %p15 = scmp.ge.s32.totalorder %s14, 6
      %s21 = sphi 0, %s33
      %s22 = sphi 0, %s29
      %s23 = sphi 0, %s21
      %s24 = sphi 0, %s22
      %s25 = sphi 0, %s23
      %s26 = sphi 0, %s24
      %s36 = sphi 0, %s38
      %s39 = sphi 0, %s36
      %s40 = sphi 0, %s39
      %s56 = sphi 0, %s40
      %s62 = sphi 0, %s64
      %s65 = sphi 0, %s62
      %s66 = sphi 0, %s65
      %s82 = sphi 0, %s66
      %s88 = sphi 0, %s90
      %s91 = sphi 0, %s88
      %s92 = sphi 0, %s91
      %s108 = sphi 0, %s92
    $region4: #{tpu_custom_call.1} parent=1 // loop_header_branch
      %17 = sbr.rel (%p15) target = $region8
    $region5: #{tpu_custom_call.1} parent=1 // loop_body
      %s19 = ssub.s32 %s14, 1
      %s20 = ssub.s32 %s14, 2
      %s27 = sadd.s32 1, %s22
      %p28 = scmp.ge.s32.totalorder %s27, 2
      %s29 = scalar_select %p28, 0, %s27
      %s30 = sadd.s32 1, %s21
      %s31 = scalar_select %p28, %s30, %s21
      %p32 = scmp.ge.s32.totalorder %s31, 2
      %s33 = scalar_select %p32, 0, %s31
      %s34 = ssub.s32 %s21, %s33
      %p35 = scmp.eq.s32.totalorder %s34, 0
      %s37 = sadd.s32 %s36, 1
      %s38 = scalar_select %p35, %s36, %s37
      %p41 = pneg %p35
      %p42 = scmp.eq.s32.totalorder %s14, 3
      %p43 = por %p41, %p42
      %p44 = scmp.ne.s32.totalorder %s36, %s39
      %p45 = scmp.eq.s32.totalorder %s14, 0
      %p46 = por %p44, %p45
      %p47 = scmp.ne.s32.totalorder %s36, %s39
      %p48 = scmp.eq.s32.totalorder %s19, 3
      %p49 = por %p47, %p48
      %p50 = scmp.ne.s32.totalorder %s39, %s40
      %p51 = scmp.eq.s32.totalorder %s19, 0
      %p52 = por %p50, %p51
      %p53 = scmp.ne.s32.totalorder %s39, %s40
      %p54 = scmp.eq.s32.totalorder %s20, 3
      %p55 = por %p53, %p54
      %p57 = scmp.ne.s32.totalorder %s40, %s56
      %p58 = scmp.eq.s32.totalorder %s20, 0
      %p59 = por %p57, %p58
      %s60 = ssub.s32 %s22, %s29
      %p61 = scmp.eq.s32.totalorder %s60, 0
      %s63 = sadd.s32 %s62, 1
      %s64 = scalar_select %p61, %s62, %s63
      %p67 = pneg %p61
      %p68 = scmp.eq.s32.totalorder %s14, 3
      %p69 = por %p67, %p68
      %p70 = scmp.ne.s32.totalorder %s62, %s65
      %p71 = scmp.eq.s32.totalorder %s14, 0
      %p72 = por %p70, %p71
      %p73 = scmp.ne.s32.totalorder %s62, %s65
      %p74 = scmp.eq.s32.totalorder %s19, 3
      %p75 = por %p73, %p74
      %p76 = scmp.ne.s32.totalorder %s65, %s66
      %p77 = scmp.eq.s32.totalorder %s19, 0
      %p78 = por %p76, %p77
      %p79 = scmp.ne.s32.totalorder %s65, %s66
      %p80 = scmp.eq.s32.totalorder %s20, 3
      %p81 = por %p79, %p80
      %p83 = scmp.ne.s32.totalorder %s66, %s82
      %p84 = scmp.eq.s32.totalorder %s20, 0
      %p85 = por %p83, %p84
      %s86 = ssub.s32 %s21, %s33
      %p87 = scmp.eq.s32.totalorder %s86, 0
      %s89 = sadd.s32 %s88, 1
      %s90 = scalar_select %p87, %s88, %s89
      %p93 = pneg %p87
      %p94 = scmp.eq.s32.totalorder %s14, 3
      %p95 = por %p93, %p94
      %p96 = scmp.ne.s32.totalorder %s88, %s91
      %p97 = scmp.eq.s32.totalorder %s14, 0
      %p98 = por %p96, %p97
      %p99 = scmp.ne.s32.totalorder %s88, %s91
      %p100 = scmp.eq.s32.totalorder %s19, 3
      %p101 = por %p99, %p100
      %p102 = scmp.ne.s32.totalorder %s91, %s92
      %p103 = scmp.eq.s32.totalorder %s19, 0
      %p104 = por %p102, %p103
      %p105 = scmp.ne.s32.totalorder %s91, %s92
      %p106 = scmp.eq.s32.totalorder %s20, 3
      %p107 = por %p105, %p106
      %p109 = scmp.ne.s32.totalorder %s92, %s108
      %p110 = scmp.eq.s32.totalorder %s20, 0
      %p111 = por %p109, %p110
      %p112 = scmp.le.s32.totalorder 1, %s14
      %p113 = scmp.lt.s32.totalorder %s14, 5
      %p114 = pnand %p112, %p113
      %p115 = pneg %p114
      // Predicated region
      $region9: #{tpu_custom_call.1} parent=5 // pred_check
        _
      $region10: #{tpu_custom_call.1} parent=5 // pred_check_branch
        %117 = sbr.rel (%p114) target = $region12
      $region11: #{tpu_custom_call.1} parent=5 // pred_region
        %s118 = ssub.s32 %s14, 1
      $region12: #{tpu_custom_call.1} parent=5 // pred_fallthru
        _
      %p119 = scmp.lt.s32.totalorder %s14, 4
      // Predicated region
      $region13: #{tpu_custom_call.1} parent=5 // pred_check
        %p120 = pneg %p119
      $region14: #{tpu_custom_call.1} parent=5 // pred_check_branch
        %122 = sbr.rel (%p120) target = $region16
      $region15: #{tpu_custom_call.1} parent=5 // pred_region
        // Predicated region
        $region17: #{tpu_custom_call.1} parent=15 // pred_check
          %p123 = pneg %p46
        $region18: #{tpu_custom_call.1} parent=15 // pred_check_branch
          %125 = sbr.rel (%p123) target = $region20
        $region19: #{tpu_custom_call.1} parent=15 // pred_region
          %s126 = sand.u32 %s36, 1
          %s127 = scalar_lea.sflag [#allocation6], %s126
          %s128 = sand.u32 %s36, 1
          %s129 = smul.addr %s128, 64
          %s130 = scalar_lea.vmem [#allocation5], %s129
          %s131 = smul.u32 8, %s21
          %s133 = ssub.s32 1024, 1024
          %134 = vsyncadd %s127, %s133
          %s135 = smul.addr %s131, 128
          %s136 = scalar_lea.hbm %s0, %s135
          %s137 = sshll.u32 %s130, 4
          %s138 = int_to_ptr.vmem [resolvable:$true] %s137
          %143 = dma.hbm_to_vmem [thread:$0]  %s136, 1024, %s138, %s127, 128, 128, 8
        $region20: #{tpu_custom_call.1} parent=15 // pred_fallthru
          _
        // Predicated region
        $region21: #{tpu_custom_call.1} parent=15 // pred_check
          %p144 = pneg %p72
        $region22: #{tpu_custom_call.1} parent=15 // pred_check_branch
          %146 = sbr.rel (%p144) target = $region24
        $region23: #{tpu_custom_call.1} parent=15 // pred_region
          %s147 = sand.u32 %s62, 1
          %s148 = scalar_lea.sflag [#allocation8], %s147
          %s149 = sand.u32 %s62, 1
          %s150 = smul.addr %s149, 64
          %s151 = scalar_lea.vmem [#allocation7], %s150
          %s152 = smul.u32 8, %s22
          %s154 = ssub.s32 1024, 1024
          %155 = vsyncadd %s148, %s154
          %s156 = smul.addr %s152, 128
          %s157 = scalar_lea.hbm %s1, %s156
          %s158 = sshll.u32 %s151, 4
          %s159 = int_to_ptr.vmem [resolvable:$true] %s158
          %164 = dma.hbm_to_vmem [thread:$0]  %s157, 1024, %s159, %s148, 128, 128, 8
        $region24: #{tpu_custom_call.1} parent=15 // pred_fallthru
          _
      $region16: #{tpu_custom_call.1} parent=5 // pred_fallthru
        _
      %p165 = scmp.le.s32.totalorder 1, %s14
      %p166 = scmp.lt.s32.totalorder %s14, 5
      %p167 = pnand %p165, %p166
      %p168 = pneg %p167
      // Predicated region
      $region25: #{tpu_custom_call.1} parent=5 // pred_check
        _
      $region26: #{tpu_custom_call.1} parent=5 // pred_check_branch
        %170 = sbr.rel (%p167) target = $region28
      $region27: #{tpu_custom_call.1} parent=5 // pred_region
        %s171 = ssub.s32 %s14, 1
        %s172 = sand.u32 %s39, 1
        %s173 = scalar_lea.sflag [#allocation6], %s172
        %s174 = sand.u32 %s39, 1
        %s175 = smul.addr %s174, 64
        %s176 = scalar_lea.vmem [#allocation5], %s175
        // Predicated region
        $region29: #{tpu_custom_call.1} parent=27 // pred_check
          %p177 = pneg %p52
        $region30: #{tpu_custom_call.1} parent=27 // pred_check_branch
          %179 = sbr.rel (%p177) target = $region32
        $region31: #{tpu_custom_call.1} parent=27 // pred_region
          %180 = dma.done %s173, 1024
        $region32: #{tpu_custom_call.1} parent=27 // pred_fallthru
          _
        %s181 = sand.u32 %s65, 1
        %s182 = scalar_lea.sflag [#allocation8], %s181
        %s183 = sand.u32 %s65, 1
        %s184 = smul.addr %s183, 64
        %s185 = scalar_lea.vmem [#allocation7], %s184
        // Predicated region
        $region33: #{tpu_custom_call.1} parent=27 // pred_check
          %p186 = pneg %p78
        $region34: #{tpu_custom_call.1} parent=27 // pred_check_branch
          %188 = sbr.rel (%p186) target = $region36
        $region35: #{tpu_custom_call.1} parent=27 // pred_region
          %189 = dma.done %s182, 1024
        $region36: #{tpu_custom_call.1} parent=27 // pred_fallthru
          _
        %s190 = sand.u32 %s39, 1
        %s191 = scalar_lea.sflag [#allocation6], %s190
        %s192 = sand.u32 %s39, 1
        %s193 = smul.addr %s192, 64
        %s194 = scalar_lea.vmem [#allocation5], %s193
        %p195 = pneg %p52
        %p196 = pneg %p49
        %s197 = sand.u32 %s65, 1
        %s198 = scalar_lea.sflag [#allocation8], %s197
        %s199 = sand.u32 %s65, 1
        %s200 = smul.addr %s199, 64
        %s201 = scalar_lea.vmem [#allocation7], %s200
        %p202 = pneg %p78
        %p203 = pneg %p75
        %p204 = pneg %p104
        %p205 = pneg %p101
        %s206 = smul.u32 8, %s23
        %p207 = scmp.lt.s32.totalorder %s206, 15
        %s208 = scalar_select %p207, %s206, 15
        %s209 = smul.addr %s208, 8
        %s210 = scalar_lea.vmem %s2, %s209
        %s211 = smul.u32 8, %s23
        %s212 = smul.u32 8, %s24
        %s213 = smul.u32 8, %s23
        %p214 = scmp.lt.s32.totalorder %s213, 15
        %s215 = scalar_select %p214, %s213, 15
        %s216 = smul.addr %s215, 8
        %s217 = scalar_lea.vmem %s2, %s216
        %s218 = smul.u32 8, %s23
        %p219 = scmp.eq.s32.totalorder %s24, 0
        // Predicated region
        $region37: #{tpu_custom_call.1} parent=27 // pred_check
          %p220 = pneg %p219
        $region38: #{tpu_custom_call.1} parent=27 // pred_check_branch
          %222 = sbr.rel (%p220) target = $region40
        $region39: #{tpu_custom_call.1} parent=27 // pred_region
          %vm223 = vcmask 7168
          %224 = vst.msk [vmem:[#allocation2] sm:$0xff] %vm223, -inf
          %225 = vst.msk [vmem:[#allocation2 + $0x8] sm:$0xff] %vm223, -inf
          %226 = vst.msk [vmem:[#allocation2 + $0x10] sm:$0xff] %vm223, -inf
          %227 = vst.msk [vmem:[#allocation2 + $0x18] sm:$0xff] %vm223, -inf
          %228 = vst.msk [vmem:[#allocation2 + $0x20] sm:$0xff] %vm223, -inf
          %229 = vst.msk [vmem:[#allocation2 + $0x28] sm:$0xff] %vm223, -inf
          %230 = vst.msk [vmem:[#allocation2 + $0x30] sm:$0xff] %vm223, -inf
          %231 = vst.msk [vmem:[#allocation2 + $0x38] sm:$0xff] %vm223, -inf
          %232 = vst.msk [vmem:[#allocation3] sm:$0xff] %vm223, 0.0
          %233 = vst.msk [vmem:[#allocation3 + $0x8] sm:$0xff] %vm223, 0.0
          %234 = vst.msk [vmem:[#allocation3 + $0x10] sm:$0xff] %vm223, 0.0
          %235 = vst.msk [vmem:[#allocation3 + $0x18] sm:$0xff] %vm223, 0.0
          %236 = vst.msk [vmem:[#allocation3 + $0x20] sm:$0xff] %vm223, 0.0
          %237 = vst.msk [vmem:[#allocation3 + $0x28] sm:$0xff] %vm223, 0.0
          %238 = vst.msk [vmem:[#allocation3 + $0x30] sm:$0xff] %vm223, 0.0
          %239 = vst.msk [vmem:[#allocation3 + $0x38] sm:$0xff] %vm223, 0.0
          %240 = vst.msk [vmem:[#allocation4] sm:$0xff] %vm223, 0.0
          %241 = vst.msk [vmem:[#allocation4 + $0x8] sm:$0xff] %vm223, 0.0
          %242 = vst.msk [vmem:[#allocation4 + $0x10] sm:$0xff] %vm223, 0.0
          %243 = vst.msk [vmem:[#allocation4 + $0x18] sm:$0xff] %vm223, 0.0
          %244 = vst.msk [vmem:[#allocation4 + $0x20] sm:$0xff] %vm223, 0.0
          %245 = vst.msk [vmem:[#allocation4 + $0x28] sm:$0xff] %vm223, 0.0
          %246 = vst.msk [vmem:[#allocation4 + $0x30] sm:$0xff] %vm223, 0.0
          %247 = vst.msk [vmem:[#allocation4 + $0x38] sm:$0xff] %vm223, 0.0
        $region40: #{tpu_custom_call.1} parent=27 // pred_fallthru
          _
        %v248 = vld [vmem:[%s176] sm:$0xff]
        %v249 = vld [vmem:[%s176 + $0x8] sm:$0xff]
        %v250 = vld [vmem:[%s176 + $0x10] sm:$0xff]
        %v251 = vld [vmem:[%s176 + $0x18] sm:$0xff]
        %v252 = vld [vmem:[%s176 + $0x20] sm:$0xff]
        %v253 = vld [vmem:[%s176 + $0x28] sm:$0xff]
        %v254 = vld [vmem:[%s176 + $0x30] sm:$0xff]
        %v255 = vld [vmem:[%s176 + $0x38] sm:$0xff]
        %v256 = vld [vmem:[%s185] sm:$0xff]
        %v257 = vld [vmem:[%s185 + $0x8] sm:$0xff]
        %v258 = vld [vmem:[%s185 + $0x10] sm:$0xff]
        %v259 = vld [vmem:[%s185 + $0x18] sm:$0xff]
        %v260 = vld [vmem:[%s185 + $0x20] sm:$0xff]
        %v261 = vld [vmem:[%s185 + $0x28] sm:$0xff]
        %v262 = vld [vmem:[%s185 + $0x30] sm:$0xff]
        %v263 = vld [vmem:[%s185 + $0x38] sm:$0xff]
        %264 = vmatprep.subr.mxu0 0.0
        %265 = vmatpush1.xpose.msra.mxu0 %v256
        %266 = vmatprep.subr.mxu0 0.0
        %267 = vmatpush1.xpose.msra.mxu0 %v257
        %268 = vmatprep.subr.mxu0 0.0
        %269 = vmatpush1.xpose.msra.mxu0 %v258
        %270 = vmatprep.subr.mxu0 0.0
        %271 = vmatpush1.xpose.msra.mxu0 %v259
        %272 = vmatprep.subr.mxu0 0.0
        %273 = vmatpush1.xpose.msra.mxu0 %v260
        %274 = vmatprep.subr.mxu0 0.0
        %275 = vmatpush1.xpose.msra.mxu0 %v261
        %276 = vmatprep.subr.mxu0 0.0
        %277 = vmatpush1.xpose.msra.mxu0 %v262
        %278 = vmatprep.subr.mxu0 0.0
        %279 = vmatpush1.xpose.msra.mxu0 %v263
        %280 = vmatprep.subr.mxu0 0.0
        %281 = vmatpush1.xpose.msra.mxu0 0.0
        %282 = vmatprep.subr.mxu0 0.0
        %283 = vmatpush1.xpose.msra.mxu0 0.0
        %284 = vmatprep.subr.mxu0 0.0
        %285 = vmatpush1.xpose.msra.mxu0 0.0
        %286 = vmatprep.subr.mxu0 0.0
        %287 = vmatpush1.xpose.msra.mxu0 0.0
        %288 = vmatprep.subr.mxu0 0.0
        %289 = vmatpush1.xpose.msra.mxu0 0.0
        %290 = vmatprep.subr.mxu0 0.0
        %291 = vmatpush1.xpose.msra.mxu0 0.0
        %292 = vmatprep.subr.mxu0 0.0
        %293 = vmatpush1.xpose.msra.mxu0 0.0
        %294 = vmatprep.subr.mxu0 0.0
        %295 = vmatpush1.xpose.msra.mxu0 0.0
        %296 = vmatprep.subr.mxu0 0.0
        %297 = vmatpush1.xpose.msra.mxu0 0.0
        %298 = vmatprep.subr.mxu0 0.0
        %299 = vmatpush1.xpose.msra.mxu0 0.0
        %300 = vmatprep.subr.mxu0 0.0
        %301 = vmatpush1.xpose.msra.mxu0 0.0
        %302 = vmatprep.subr.mxu0 0.0
        %303 = vmatpush1.xpose.msra.mxu0 0.0
        %304 = vmatprep.subr.mxu0 0.0
        %305 = vmatpush1.xpose.msra.mxu0 0.0
        %306 = vmatprep.subr.mxu0 0.0
        %307 = vmatpush1.xpose.msra.mxu0 0.0
        %308 = vmatprep.subr.mxu0 0.0
        %309 = vmatpush1.xpose.msra.mxu0 0.0
        %310 = vmatprep.subr.mxu0 0.0
        %311 = vmatpush1.xpose.msra.mxu0 0.0
        %312 = vmatprep.subr.mxu0 0.0
        %313 = vmatpush1.xpose.msra.mxu0 0.0
        %314 = vmatprep.subr.mxu0 0.0
        %315 = vmatpush1.xpose.msra.mxu0 0.0
        %316 = vmatprep.subr.mxu0 0.0
        %317 = vmatpush1.xpose.msra.mxu0 0.0
        %318 = vmatprep.subr.mxu0 0.0
        %319 = vmatpush1.xpose.msra.mxu0 0.0
        %320 = vmatprep.subr.mxu0 0.0
        %321 = vmatpush1.xpose.msra.mxu0 0.0
        %322 = vmatprep.subr.mxu0 0.0
        %323 = vmatpush1.xpose.msra.mxu0 0.0
        %324 = vmatprep.subr.mxu0 0.0
        %325 = vmatpush1.xpose.msra.mxu0 0.0
        %326 = vmatprep.subr.mxu0 0.0
        %327 = vmatpush1.xpose.msra.mxu0 0.0
        %328 = vmatprep.mubr.f32.mxu0 0.0
        %329 = vmatmul.mubr.f32.gmra.mrb[0].mxu0 %v248
        %v330 = vpop.f32.mrb[0].mxu0
        %v331 = vadd.f32 0.0, %v330
        %v332 = vpop.f32.mrb[0].mxu0
        %333 = vmatprep.mubr.f32.mxu0 0.0
        %334 = vmatmul.mubr.f32.gmra.mrb[0].mxu0 %v249
        %v335 = vpop.f32.mrb[0].mxu0
        %v336 = vadd.f32 0.0, %v335
        %v337 = vpop.f32.mrb[0].mxu0
        %338 = vmatprep.mubr.f32.mxu0 0.0
        %339 = vmatmul.mubr.f32.gmra.mrb[0].mxu0 %v250
        %v340 = vpop.f32.mrb[0].mxu0
        %v341 = vadd.f32 0.0, %v340
        %v342 = vpop.f32.mrb[0].mxu0
        %343 = vmatprep.mubr.f32.mxu0 0.0
        %344 = vmatmul.mubr.f32.gmra.mrb[0].mxu0 %v251
        %v345 = vpop.f32.mrb[0].mxu0
        %v346 = vadd.f32 0.0, %v345
        %v347 = vpop.f32.mrb[0].mxu0
        %348 = vmatprep.mubr.f32.mxu0 0.0
        %349 = vmatmul.mubr.f32.gmra.mrb[0].mxu0 %v252
        %v350 = vpop.f32.mrb[0].mxu0
        %v351 = vadd.f32 0.0, %v350
        %v352 = vpop.f32.mrb[0].mxu0
        %353 = vmatprep.mubr.f32.mxu0 0.0
        %354 = vmatmul.mubr.f32.gmra.mrb[0].mxu0 %v253
        %v355 = vpop.f32.mrb[0].mxu0
        %v356 = vadd.f32 0.0, %v355
        %v357 = vpop.f32.mrb[0].mxu0
        %358 = vmatprep.mubr.f32.mxu0 0.0
        %359 = vmatmul.mubr.f32.gmra.mrb[0].mxu0 %v254
        %v360 = vpop.f32.mrb[0].mxu0
        %v361 = vadd.f32 0.0, %v360
        %v362 = vpop.f32.mrb[0].mxu0
        %363 = vmatprep.mubr.f32.mxu0 0.0
        %364 = vmatmul.mubr.f32.gmra.mrb[0].mxu0 %v255
        %v365 = vpop.f32.mrb[0].mxu0
        %v366 = vadd.f32 0.0, %v365
        %v367 = vpop.f32.mrb[0].mxu0
        %368 = vdwg.mxu0
        %s369 = smul.u32 %s23, 64
        %s370 = sadd.s32 %s369, 64
        %p371 = scmp.lt.s32.totalorder %s370, 0
        %s372 = ssub.s32 0, %s370
        %s373 = scalar_select %p371, %s372, %s370
        %s374 = sand.u32 %s373, 127
        %s375 = ssub.s32 0, %s374
        %s376 = scalar_select %p371, %s375, %s374
        %p377 = scmp.ne.s32.totalorder %s376, 0
        %p378 = scmp.lt.s32.totalorder %s376, 0
        %p379 = pnand %p378, %p377
        %p380 = pneg %p379
        %s381 = sadd.s32 %s376, 128
        %s382 = scalar_select %p380, %s381, %s376
        %s383 = smul.u32 %s24, 64
        %p384 = scmp.ge.s32.totalorder %s383, %s382
        %s385 = sadd.s32 %s382, 64
        %p386 = scmp.lt.s32.totalorder %s383, %s385
        %p387 = pnand %p384, %p386
        %p388 = pneg %p387
        // Predicated region
        $region41: #{tpu_custom_call.1} parent=27 // pred_check
          _
        $region42: #{tpu_custom_call.1} parent=27 // pred_check_branch
          %390 = sbr.rel (%p387) target = $region44
        $region43: #{tpu_custom_call.1} parent=27 // pred_region
          %v391 = vlaneseq
          %v392 = vshrl.u32 %v391, 7
          %v393 = vadd.s32 %v392, 8
          %v394 = vadd.s32 %v392, 16
          %v395 = vadd.s32 %v392, 24
          %v396 = vadd.s32 %v392, 32
          %v397 = vadd.s32 %v392, 40
          %v398 = vadd.s32 %v392, 48
          %v399 = vadd.s32 %v392, 56
          %v400 = vstv %s369
          %v401 = vadd.s32 %v400, %v392
          %v402 = vadd.s32 %v400, %v393
          %v403 = vadd.s32 %v400, %v394
          %v404 = vadd.s32 %v400, %v395
          %v405 = vadd.s32 %v400, %v396
          %v406 = vadd.s32 %v400, %v397
          %v407 = vadd.s32 %v400, %v398
          %v408 = vadd.s32 %v400, %v399
          %v409 = vlaneseq
          %v410 = vand.u32 %v409, 127
          %v411 = vstv %s383
          %v412 = vadd.s32 %v411, %v410
          %v413 = vsub.s32 %v401, %v412
          %v414 = vsub.s32 %v402, %v412
          %v415 = vsub.s32 %v403, %v412
          %v416 = vsub.s32 %v404, %v412
          %v417 = vsub.s32 %v405, %v412
          %v418 = vsub.s32 %v406, %v412
          %v419 = vsub.s32 %v407, %v412
          %v420 = vsub.s32 %v408, %v412
          %vm421 = vcmp.lt.s32.totalorder %v413, 0
          %v422 = vsub.s32 0, %v413
          %v423 = vsel %vm421, %v422, %v413
          %vm424 = vcmp.lt.s32.totalorder %v414, 0
          %v425 = vsub.s32 0, %v414
          %v426 = vsel %vm424, %v425, %v414
          %vm427 = vcmp.lt.s32.totalorder %v415, 0
          %v428 = vsub.s32 0, %v415
          %v429 = vsel %vm427, %v428, %v415
          %vm430 = vcmp.lt.s32.totalorder %v416, 0
          %v431 = vsub.s32 0, %v416
          %v432 = vsel %vm430, %v431, %v416
          %vm433 = vcmp.lt.s32.totalorder %v417, 0
          %v434 = vsub.s32 0, %v417
          %v435 = vsel %vm433, %v434, %v417
          %vm436 = vcmp.lt.s32.totalorder %v418, 0
          %v437 = vsub.s32 0, %v418
          %v438 = vsel %vm436, %v437, %v418
          %vm439 = vcmp.lt.s32.totalorder %v419, 0
          %v440 = vsub.s32 0, %v419
          %v441 = vsel %vm439, %v440, %v419
          %vm442 = vcmp.lt.s32.totalorder %v420, 0
          %v443 = vsub.s32 0, %v420
          %v444 = vsel %vm442, %v443, %v420
          %vm445 = vcmp.eq.s32.totalorder %v423, 64
          %vm446 = vcmp.eq.s32.totalorder %v426, 64
          %vm447 = vcmp.eq.s32.totalorder %v429, 64
          %vm448 = vcmp.eq.s32.totalorder %v432, 64
          %vm449 = vcmp.eq.s32.totalorder %v435, 64
          %vm450 = vcmp.eq.s32.totalorder %v438, 64
          %vm451 = vcmp.eq.s32.totalorder %v441, 64
          %vm452 = vcmp.eq.s32.totalorder %v444, 64
          %v453 = vld [vmem:[#allocation4] sm:$0xff]
          %v454 = vld [vmem:[#allocation4 + $0x8] sm:$0xff]
          %v455 = vld [vmem:[#allocation4 + $0x10] sm:$0xff]
          %v456 = vld [vmem:[#allocation4 + $0x18] sm:$0xff]
          %v457 = vld [vmem:[#allocation4 + $0x20] sm:$0xff]
          %v458 = vld [vmem:[#allocation4 + $0x28] sm:$0xff]
          %v459 = vld [vmem:[#allocation4 + $0x30] sm:$0xff]
          %v460 = vld [vmem:[#allocation4 + $0x38] sm:$0xff]
          %v461 = vsel %vm445, %v331, 0.0
          %v462 = vsel %vm446, %v336, 0.0
          %v463 = vsel %vm447, %v341, 0.0
          %v464 = vsel %vm448, %v346, 0.0
          %v465 = vsel %vm449, %v351, 0.0
          %v466 = vsel %vm450, %v356, 0.0
          %v467 = vsel %vm451, %v361, 0.0
          %v468 = vsel %vm452, %v366, 0.0
          %vm469 = vcmask 523264
          %v470 = vsel %vm469, %v461, 0.0
          %471 = vadd.xlane.f32.xlu0 %v470
          %v472 = vpop.xlane.xlu0 %471
          %v473 = vsel %vm469, %v462, 0.0
          %474 = vadd.xlane.f32.xlu0 %v473
          %v475 = vpop.xlane.xlu0 %474
          %v476 = vsel %vm469, %v463, 0.0
          %477 = vadd.xlane.f32.xlu0 %v476
          %v478 = vpop.xlane.xlu0 %477
          %v479 = vsel %vm469, %v464, 0.0
          %480 = vadd.xlane.f32.xlu0 %v479
          %v481 = vpop.xlane.xlu0 %480
          %v482 = vsel %vm469, %v465, 0.0
          %483 = vadd.xlane.f32.xlu0 %v482
          %v484 = vpop.xlane.xlu0 %483
          %v485 = vsel %vm469, %v466, 0.0
          %486 = vadd.xlane.f32.xlu0 %v485
          %v487 = vpop.xlane.xlu0 %486
          %v488 = vsel %vm469, %v467, 0.0
          %489 = vadd.xlane.f32.xlu0 %v488
          %v490 = vpop.xlane.xlu0 %489
          %v491 = vsel %vm469, %v468, 0.0
          %492 = vadd.xlane.f32.xlu0 %v491
          %v493 = vpop.xlane.xlu0 %492
          %v494 = vadd.f32 %v453, %v472
          %v495 = vadd.f32 %v454, %v475
          %v496 = vadd.f32 %v455, %v478
          %v497 = vadd.f32 %v456, %v481
          %v498 = vadd.f32 %v457, %v484
          %v499 = vadd.f32 %v458, %v487
          %v500 = vadd.f32 %v459, %v490
          %v501 = vadd.f32 %v460, %v493
          %vm502 = vcmask 7168
          %503 = vst.msk [vmem:[#allocation4] sm:$0xff] %vm502, %v494
          %504 = vst.msk [vmem:[#allocation4 + $0x8] sm:$0xff] %vm502, %v495
          %505 = vst.msk [vmem:[#allocation4 + $0x10] sm:$0xff] %vm502, %v496
          %506 = vst.msk [vmem:[#allocation4 + $0x18] sm:$0xff] %vm502, %v497
          %507 = vst.msk [vmem:[#allocation4 + $0x20] sm:$0xff] %vm502, %v498
          %508 = vst.msk [vmem:[#allocation4 + $0x28] sm:$0xff] %vm502, %v499
          %509 = vst.msk [vmem:[#allocation4 + $0x30] sm:$0xff] %vm502, %v500
          %510 = vst.msk [vmem:[#allocation4 + $0x38] sm:$0xff] %vm502, %v501
        $region44: #{tpu_custom_call.1} parent=27 // pred_fallthru
          _
        %v511 = vsub.f32 %v331, 2.0
        %v512 = vsub.f32 %v336, 2.0
        %v513 = vsub.f32 %v341, 2.0
        %v514 = vsub.f32 %v346, 2.0
        %v515 = vsub.f32 %v351, 2.0
        %v516 = vsub.f32 %v356, 2.0
        %v517 = vsub.f32 %v361, 2.0
        %v518 = vsub.f32 %v366, 2.0
        %v519 = vmul.f32 %v511, 1.442695
        %v520 = vpow.pop %v519
        %v521 = vmul.f32 %v512, 1.442695
        %v522 = vpow.pop %v521
        %v523 = vmul.f32 %v513, 1.442695
        %v524 = vpow.pop %v523
        %v525 = vmul.f32 %v514, 1.442695
        %v526 = vpow.pop %v525
        %v527 = vmul.f32 %v515, 1.442695
        %v528 = vpow.pop %v527
        %v529 = vmul.f32 %v516, 1.442695
        %v530 = vpow.pop %v529
        %v531 = vmul.f32 %v517, 1.442695
        %v532 = vpow.pop %v531
        %v533 = vmul.f32 %v518, 1.442695
        %v534 = vpow.pop %v533
        %v535 = vld [vmem:[#allocation3] sm:$0xff]
        %v536 = vld [vmem:[#allocation3 + $0x8] sm:$0xff]
        %v537 = vld [vmem:[#allocation3 + $0x10] sm:$0xff]
        %v538 = vld [vmem:[#allocation3 + $0x18] sm:$0xff]
        %v539 = vld [vmem:[#allocation3 + $0x20] sm:$0xff]
        %v540 = vld [vmem:[#allocation3 + $0x28] sm:$0xff]
        %v541 = vld [vmem:[#allocation3 + $0x30] sm:$0xff]
        %v542 = vld [vmem:[#allocation3 + $0x38] sm:$0xff]
        %vm543 = vcmask 523264
        %v544 = vsel %vm543, %v520, 0.0
        %545 = vadd.xlane.f32.xlu0 %v544
        %v546 = vpop.xlane.xlu0 %545
        %v547 = vsel %vm543, %v522, 0.0
        %548 = vadd.xlane.f32.xlu0 %v547
        %v549 = vpop.xlane.xlu0 %548
        %v550 = vsel %vm543, %v524, 0.0
        %551 = vadd.xlane.f32.xlu0 %v550
        %v552 = vpop.xlane.xlu0 %551
        %v553 = vsel %vm543, %v526, 0.0
        %554 = vadd.xlane.f32.xlu0 %v553
        %v555 = vpop.xlane.xlu0 %554
        %v556 = vsel %vm543, %v528, 0.0
        %557 = vadd.xlane.f32.xlu0 %v556
        %v558 = vpop.xlane.xlu0 %557
        %v559 = vsel %vm543, %v530, 0.0
        %560 = vadd.xlane.f32.xlu0 %v559
        %v561 = vpop.xlane.xlu0 %560
        %v562 = vsel %vm543, %v532, 0.0
        %563 = vadd.xlane.f32.xlu0 %v562
        %v564 = vpop.xlane.xlu0 %563
        %v565 = vsel %vm543, %v534, 0.0
        %566 = vadd.xlane.f32.xlu0 %v565
        %v567 = vpop.xlane.xlu0 %566
        %v568 = vadd.f32 %v535, %v546
        %v569 = vadd.f32 %v536, %v549
        %v570 = vadd.f32 %v537, %v552
        %v571 = vadd.f32 %v538, %v555
        %v572 = vadd.f32 %v539, %v558
        %v573 = vadd.f32 %v540, %v561
        %v574 = vadd.f32 %v541, %v564
        %v575 = vadd.f32 %v542, %v567
        %vm576 = vcmask 7168
        %577 = vst.msk [vmem:[#allocation3] sm:$0xff] %vm576, %v568
        %578 = vst.msk [vmem:[#allocation3 + $0x8] sm:$0xff] %vm576, %v569
        %579 = vst.msk [vmem:[#allocation3 + $0x10] sm:$0xff] %vm576, %v570
        %580 = vst.msk [vmem:[#allocation3 + $0x18] sm:$0xff] %vm576, %v571
        %581 = vst.msk [vmem:[#allocation3 + $0x20] sm:$0xff] %vm576, %v572
        %582 = vst.msk [vmem:[#allocation3 + $0x28] sm:$0xff] %vm576, %v573
        %583 = vst.msk [vmem:[#allocation3 + $0x30] sm:$0xff] %vm576, %v574
        %584 = vst.msk [vmem:[#allocation3 + $0x38] sm:$0xff] %vm576, %v575
        %p585 = scmp.eq.s32.totalorder %s24, 1
        // Predicated region
        $region45: #{tpu_custom_call.1} parent=27 // pred_check
          %p586 = pneg %p585
        $region46: #{tpu_custom_call.1} parent=27 // pred_check_branch
          %588 = sbr.rel (%p586) target = $region48
        $region47: #{tpu_custom_call.1} parent=27 // pred_region
          %v589 = vld [vmem:[#allocation3] sm:$0xff]
          %v590 = vld [vmem:[#allocation3 + $0x8] sm:$0xff]
          %v591 = vld [vmem:[#allocation3 + $0x10] sm:$0xff]
          %v592 = vld [vmem:[#allocation3 + $0x18] sm:$0xff]
          %v593 = vld [vmem:[#allocation3 + $0x20] sm:$0xff]
          %v594 = vld [vmem:[#allocation3 + $0x28] sm:$0xff]
          %v595 = vld [vmem:[#allocation3 + $0x30] sm:$0xff]
          %v596 = vld [vmem:[#allocation3 + $0x38] sm:$0xff]
          %v597 = vsub.f32 %v589, 1.0
          %v598 = vsub.f32 %v590, 1.0
          %v599 = vsub.f32 %v591, 1.0
          %v600 = vsub.f32 %v592, 1.0
          %v601 = vsub.f32 %v593, 1.0
          %v602 = vsub.f32 %v594, 1.0
          %v603 = vsub.f32 %v595, 1.0
          %v604 = vsub.f32 %v596, 1.0
          %v605 = vlog2.pop %v597
          %v606 = vmul.f32 %v605, 0.6931472
          %v607 = vlog2.pop %v598
          %v608 = vmul.f32 %v607, 0.6931472
          %v609 = vlog2.pop %v599
          %v610 = vmul.f32 %v609, 0.6931472
          %v611 = vlog2.pop %v600
          %v612 = vmul.f32 %v611, 0.6931472
          %v613 = vlog2.pop %v601
          %v614 = vmul.f32 %v613, 0.6931472
          %v615 = vlog2.pop %v602
          %v616 = vmul.f32 %v615, 0.6931472
          %v617 = vlog2.pop %v603
          %v618 = vmul.f32 %v617, 0.6931472
          %v619 = vlog2.pop %v604
          %v620 = vmul.f32 %v619, 0.6931472
          %v621 = vadd.f32 %v606, 2.0
          %v622 = vadd.f32 %v608, 2.0
          %v623 = vadd.f32 %v610, 2.0
          %v624 = vadd.f32 %v612, 2.0
          %v625 = vadd.f32 %v614, 2.0
          %v626 = vadd.f32 %v616, 2.0
          %v627 = vadd.f32 %v618, 2.0
          %v628 = vadd.f32 %v620, 2.0
          %v629 = vld [vmem:[#allocation4] sm:$0xff]
          %v630 = vld [vmem:[#allocation4 + $0x8] sm:$0xff]
          %v631 = vld [vmem:[#allocation4 + $0x10] sm:$0xff]
          %v632 = vld [vmem:[#allocation4 + $0x18] sm:$0xff]
          %v633 = vld [vmem:[#allocation4 + $0x20] sm:$0xff]
          %v634 = vld [vmem:[#allocation4 + $0x28] sm:$0xff]
          %v635 = vld [vmem:[#allocation4 + $0x30] sm:$0xff]
          %v636 = vld [vmem:[#allocation4 + $0x38] sm:$0xff]
          %v637 = vsub.f32 %v621, %v629
          %v638 = vsub.f32 %v622, %v630
          %v639 = vsub.f32 %v623, %v631
          %v640 = vsub.f32 %v624, %v632
          %v641 = vsub.f32 %v625, %v633
          %v642 = vsub.f32 %v626, %v634
          %v643 = vsub.f32 %v627, %v635
          %v644 = vsub.f32 %v628, %v636
          %645 = vst.msk [vmem:[%s217] sm:$0xff] %vm576, %v637
          %646 = vst.msk [vmem:[%s217 + $0x8] sm:$0xff] %vm576, %v638
          %647 = vst.msk [vmem:[%s217 + $0x10] sm:$0xff] %vm576, %v639
          %648 = vst.msk [vmem:[%s217 + $0x18] sm:$0xff] %vm576, %v640
          %649 = vst.msk [vmem:[%s217 + $0x20] sm:$0xff] %vm576, %v641
          %650 = vst.msk [vmem:[%s217 + $0x28] sm:$0xff] %vm576, %v642
          %651 = vst.msk [vmem:[%s217 + $0x30] sm:$0xff] %vm576, %v643
          %652 = vst.msk [vmem:[%s217 + $0x38] sm:$0xff] %vm576, %v644
        $region48: #{tpu_custom_call.1} parent=27 // pred_fallthru
          _
        %s653 = smul.u32 8, %s23
        %p654 = scmp.lt.s32.totalorder %s653, 15
        %s655 = scalar_select %p654, %s653, 15
        %s656 = smul.addr %s655, 8
        %s657 = scalar_lea.vmem %s2, %s656
        // Predicated region
        $region49: #{tpu_custom_call.1} parent=27 // pred_check
          %p658 = pneg %p101
        $region50: #{tpu_custom_call.1} parent=27 // pred_check_branch
          %660 = sbr.rel (%p658) target = $region52
        $region51: #{tpu_custom_call.1} parent=27 // pred_region
          %s661 = smul.u32 8, %s23
        $region52: #{tpu_custom_call.1} parent=27 // pred_fallthru
          _
      $region28: #{tpu_custom_call.1} parent=5 // pred_fallthru
        _
      %p662 = scmp.le.s32.totalorder 2, %s14
      // Predicated region
      $region53: #{tpu_custom_call.1} parent=5 // pred_check
        %p663 = pneg %p662
      $region54: #{tpu_custom_call.1} parent=5 // pred_check_branch
        %665 = sbr.rel (%p663) target = $region56
      $region55: #{tpu_custom_call.1} parent=5 // pred_region
        %s666 = ssub.s32 %s14, 2
        // Predicated region
        $region57: #{tpu_custom_call.1} parent=55 // pred_check
          %p667 = pneg %p107
        $region58: #{tpu_custom_call.1} parent=55 // pred_check_branch
          %669 = sbr.rel (%p667) target = $region60
        $region59: #{tpu_custom_call.1} parent=55 // pred_region
          %s670 = smul.u32 8, %s25
          %p671 = scmp.lt.s32.totalorder %s670, 15
          %s672 = scalar_select %p671, %s670, 15
          %s673 = smul.addr %s672, 8
          %s674 = scalar_lea.vmem %s2, %s673
        $region60: #{tpu_custom_call.1} parent=55 // pred_fallthru
          _
      $region56: #{tpu_custom_call.1} parent=5 // pred_fallthru
        _
    $region6: #{tpu_custom_call.1} parent=1 // loop_footer
      %s18 = sadd.s32 1, %s14
    $region7: #{tpu_custom_call.1} parent=1 // loop_footer_branch
      %13 = sbr.rel target = $region3
    $region8: #{tpu_custom_call.1} parent=1 // loop_exit
      _
    %675 = vsyncpa [#allocation6], 1
    %s676 = scalar_lea.sflag [#allocation6], 1
    %677 = vsyncpa %s676, 1
    %678 = vsyncpa [#allocation8], 1
    %s679 = scalar_lea.sflag [#allocation8], 1
    %680 = vsyncpa %s679, 1

</llo_original>
